<compile_context>
chip_gen: v7x
topology: tpu7x:2x2x1
jax: 0.10.0
libtpu: 0.0.40
codegen_flags: <defaults>
</compile_context>

<pallas_src>
import jax
import jax.numpy as jnp
from jax.experimental import pallas as pl
from jax.experimental.pallas import tpu as pltpu


def _round_up(x, m):
    return ((x + m - 1) // m) * m


def _linear_head_kernel(x_ref, w_ref, b_ref, o_ref, acc_ref):
    # x_ref : (tb, tk)   w_ref : (tk, Np)   b_ref : (1, Np)
    # o_ref : (tb, Np)   acc_ref: (tb, Np) f32 scratch (resident over k)
    k = pl.program_id(1)

    @pl.when(k == 0)
    def _():
        acc_ref[...] = jnp.zeros_like(acc_ref)

    acc_ref[...] += jnp.dot(x_ref[...], w_ref[...],
                            preferred_element_type=jnp.float32)

    @pl.when(k == pl.num_programs(1) - 1)
    def _():
        o_ref[...] = (acc_ref[...] + b_ref[...]).astype(o_ref.dtype)


def linear_head_forward(feat, weight, bias, *, block_b=256, block_k=512,
                        compute_dtype=jnp.bfloat16, out_dtype=None):
    """Fused fc head of LinearHead:  feat @ weight.T + bias.

    feat   : (B, D_in)       features from the frozen backbone
    weight : (N, D_in)       PyTorch nn.Linear layout (out_features, in_features)
    bias   : (N,)
    returns (B, N) in `out_dtype` (default: feat.dtype)
    """
    B, D_in = feat.shape
    N, D_in_w = weight.shape
    assert D_in == D_in_w, "weight / feature dim mismatch"
    if out_dtype is None:
        out_dtype = feat.dtype

    # ---- tile sizes (respect (8,128) tiling; 16 sublanes for bf16 packing) ----
    sub = 16 if jnp.dtype(compute_dtype) == jnp.dtype(jnp.bfloat16) else 8
    tb = min(_round_up(block_b, sub), _round_up(B, sub))
    tk = min(_round_up(block_k, 128), _round_up(D_in, 128))

    Bp = _round_up(B, tb)          # padded batch   (zero rows -> sliced off)
    Kp = _round_up(D_in, tk)       # padded D_in    (zero cols -> contribute 0)
    Np = _round_up(N, 128)         # padded classes -> lane-dense output stores

    # ---- wrapper-side layout / dtype prep ----
    x = feat.astype(compute_dtype)
    w_t = weight.T.astype(compute_dtype)            # (D_in, N)
    b2 = bias.astype(jnp.float32).reshape(1, N)

    if Bp != B or Kp != D_in:
        x = jnp.pad(x, ((0, Bp - B), (0, Kp - D_in)))
    if Kp != D_in or Np != N:
        w_t = jnp.pad(w_t, ((0, Kp - D_in), (0, Np - N)))
    if Np != N:
        b2 = jnp.pad(b2, ((0, 0), (0, Np - N)))

    grid = (Bp // tb, Kp // tk)    # (batch tiles: parallel, K slabs: arbitrary)

    # ---- explicit VMEM budget: double-buffered inputs/outputs + accumulator ----
    in_sz = jnp.dtype(compute_dtype).itemsize
    out_sz = jnp.dtype(out_dtype).itemsize
    vmem_bytes = (2 * tb * tk * in_sz        # x tiles
                  + 2 * tk * Np * in_sz      # W slabs
                  + 2 * Np * 4               # bias
                  + 2 * tb * Np * out_sz     # output tiles
                  + tb * Np * 4)             # f32 accumulator scratch
    vmem_limit = min(2 * vmem_bytes + (8 << 20), 64 << 20)

    out = pl.pallas_call(
        _linear_head_kernel,
        out_shape=jax.ShapeDtypeStruct((Bp, Np), out_dtype),
        grid_spec=pltpu.PrefetchScalarGridSpec(
            num_scalar_prefetch=0,
            grid=grid,
            in_specs=[
                pl.BlockSpec((tb, tk), lambda i, k: (i, k)),   # x tile
                pl.BlockSpec((tk, Np), lambda i, k: (k, 0)),   # W slab (streamed over K)
                pl.BlockSpec((1, Np), lambda i, k: (0, 0)),    # bias (tiny, constant)
            ],
            out_specs=pl.BlockSpec((tb, Np), lambda i, k: (i, 0)),
            scratch_shapes=[pltpu.VMEM((tb, Np), jnp.float32)],
        ),
        compiler_params=pltpu.CompilerParams(
            dimension_semantics=("parallel", "arbitrary"),
            vmem_limit_bytes=vmem_limit),
    )(x, w_t, b2)

    return out[:B, :N]


if __name__ == "__main__":
    # Small shapes consistent with the module (scaled-down dim_in / num_class).
    B, D_IN, NUM_CLASS = 16, 512, 256

    root = jax.random.PRNGKey(0)
    k_feat, k_w = jax.random.split(root)

    # TODO(synk): the frozen backbone `self.net` is an arbitrary external
    # module run under torch.no_grad(); its output features are generated
    # directly here and fed to the fc-head kernel.
    feat = jax.random.normal(k_feat, (B, D_IN), jnp.float32)

    # nn.Linear head with the module's init: weight ~ N(0, 0.01), bias = 0.
    weight = 0.01 * jax.random.normal(k_w, (NUM_CLASS, D_IN), jnp.float32)
    bias = jnp.zeros((NUM_CLASS,), jnp.float32)

    # Pure-JAX reference (identical to the PyTorch fc forward).
    ref = feat @ weight.T + bias

    # f32 compute path: tight tolerance.
    out_f32 = jax.block_until_ready(
        linear_head_forward(feat, weight, bias, compute_dtype=jnp.float32))
    assert out_f32.shape == (B, NUM_CLASS)
    assert jnp.allclose(out_f32, ref, atol=1e-4, rtol=1e-4), "f32 mismatch"

    # bf16 compute path (default / production config): looser tolerance.
    out_bf16 = jax.block_until_ready(linear_head_forward(feat, weight, bias))
    assert out_bf16.shape == (B, NUM_CLASS)
    assert jnp.allclose(out_bf16, ref, atol=3e-2, rtol=3e-2), "bf16 mismatch"

    print("KERNEL_OK")
</pallas_src>

<mosaic_0001>
module attributes {stable_mosaic.version = 11 : i64} {
  func.func @_linear_head_kernel(%arg0: i32, %arg1: i32, %arg2: memref<16x512xf32, #tpu.memory_space<vmem>>, %arg3: memref<512x256xf32, #tpu.memory_space<vmem>>, %arg4: memref<1x256xf32, #tpu.memory_space<vmem>>, %arg5: memref<16x256xf32, #tpu.memory_space<vmem>>, %arg6: memref<16x256xf32, #tpu.memory_space<vmem>>) attributes {dimension_semantics = [#tpu.dimension_semantics<parallel>, #tpu.dimension_semantics<arbitrary>], iteration_bounds = array<i64: 1, 1>, scalar_prefetch = 0 : i64, scratch_operands = 1 : i64, tpu.core_type = #tpu.core_type<tc>, window_params = [{transform_indices = @transform_0, window_bounds = array<i64: 16, 512>}, {transform_indices = @transform_1, window_bounds = array<i64: 512, 256>}, {pipeline_mode = #tpu.pipeline_mode<synchronous>, transform_indices = @transform_2, window_bounds = array<i64: 1, 256>}, {transform_indices = @transform_3, window_bounds = array<i64: 16, 256>}]} {
    %c0_i32 = arith.constant 0 : i32
    %0 = arith.cmpi eq, %arg1, %c0_i32 : i32
    %1 = arith.extui %0 : i1 to i32
    %c0_i32_0 = arith.constant 0 : i32
    %2 = arith.cmpi ne, %1, %c0_i32_0 : i32
    scf.if %2 {
      %cst_10 = arith.constant 0.000000e+00 : f32
      %12 = vector.broadcast %cst_10 : f32 to vector<16x256xf32>
      %c0_11 = arith.constant 0 : index
      %c0_12 = arith.constant 0 : index
      %13 = vector.load %arg6[%c0_11, %c0_12] : memref<16x256xf32, #tpu.memory_space<vmem>>, vector<16x256xf32>
      tpu.vector_store %arg6[%c0_11, %c0_12], %12 {strides = array<i32>} : memref<16x256xf32, #tpu.memory_space<vmem>>, vector<16x256xf32>,
    } else {
    }
    %c0 = arith.constant 0 : index
    %c0_1 = arith.constant 0 : index
    %3 = vector.load %arg6[%c0, %c0_1] : memref<16x256xf32, #tpu.memory_space<vmem>>, vector<16x256xf32>
    %c0_2 = arith.constant 0 : index
    %c0_3 = arith.constant 0 : index
    %4 = vector.load %arg2[%c0_2, %c0_3] : memref<16x512xf32, #tpu.memory_space<vmem>>, vector<16x512xf32>
    %c0_4 = arith.constant 0 : index
    %c0_5 = arith.constant 0 : index
    %5 = vector.load %arg3[%c0_4, %c0_5] : memref<512x256xf32, #tpu.memory_space<vmem>>, vector<512x256xf32>
    %cst = arith.constant dense<0.000000e+00> : vector<16x256xf32>
    %6 = tpu.matmul %4, %5, %cst {dimension_numbers = #tpu.dot_dimension_numbers<[1], [0], [0], [1], [0, 0, 1, 1], [], []>} : vector<16x512xf32>, vector<512x256xf32>, vector<16x256xf32> -> vector<16x256xf32>
    %7 = arith.addf %3, %6 : vector<16x256xf32>
    %c0_6 = arith.constant 0 : index
    %c0_7 = arith.constant 0 : index
    %8 = vector.load %arg6[%c0_6, %c0_7] : memref<16x256xf32, #tpu.memory_space<vmem>>, vector<16x256xf32>
    tpu.vector_store %arg6[%c0_6, %c0_7], %7 {strides = array<i32>} : memref<16x256xf32, #tpu.memory_space<vmem>>, vector<16x256xf32>,
    %c0_i32_8 = arith.constant 0 : i32
    %9 = arith.cmpi eq, %arg1, %c0_i32_8 : i32
    %10 = arith.extui %9 : i1 to i32
    %c0_i32_9 = arith.constant 0 : i32
    %11 = arith.cmpi ne, %10, %c0_i32_9 : i32
    scf.if %11 {
      %c0_10 = arith.constant 0 : index
      %c0_11 = arith.constant 0 : index
      %12 = vector.load %arg6[%c0_10, %c0_11] : memref<16x256xf32, #tpu.memory_space<vmem>>, vector<16x256xf32>
      %c0_12 = arith.constant 0 : index
      %c0_13 = arith.constant 0 : index
      %13 = vector.load %arg4[%c0_12, %c0_13] : memref<1x256xf32, #tpu.memory_space<vmem>>, vector<1x256xf32>
      %14 = vector.broadcast %13 : vector<1x256xf32> to vector<16x256xf32>
      %15 = arith.addf %12, %14 : vector<16x256xf32>
      %c0_14 = arith.constant 0 : index
      %c0_15 = arith.constant 0 : index
      %16 = vector.load %arg5[%c0_14, %c0_15] : memref<16x256xf32, #tpu.memory_space<vmem>>, vector<16x256xf32>
      tpu.vector_store %arg5[%c0_14, %c0_15], %15 {strides = array<i32>} : memref<16x256xf32, #tpu.memory_space<vmem>>, vector<16x256xf32>,
    } else {
    }
    return
  }
  func.func @transform_0(%arg0: i32, %arg1: i32) -> (i32, i32) {
    %c0_i32 = arith.constant 0 : i32
    return %arg0, %arg1 : i32, i32
  }
  func.func @transform_1(%arg0: i32, %arg1: i32) -> (i32, i32) {
    %c0_i32 = arith.constant 0 : i32
    %c0_i32_0 = arith.constant 0 : i32
    return %arg1, %c0_i32 : i32, i32
  }
  func.func @transform_2(%arg0: i32, %arg1: i32) -> (i32, i32) {
    %c0_i32 = arith.constant 0 : i32
    %c0_i32_0 = arith.constant 0 : i32
    %c0_i32_1 = arith.constant 0 : i32
    return %c0_i32, %c0_i32_0 : i32, i32
  }
  func.func @transform_3(%arg0: i32, %arg1: i32) -> (i32, i32) {
    %c0_i32 = arith.constant 0 : i32
    %c0_i32_0 = arith.constant 0 : i32
    return %arg0, %c0_i32 : i32, i32
  }
}

</mosaic_0001>

<llo_original>
// kernel: tpu_custom_call.1
$region0: #{tpu_custom_call.1}
  #allocation0 [shape = 'u32[]', space=smem, size = 0x4, offset = 0x4, fixed_abs, tag = 'smem constant byte address 0x4 - core index']
  #allocation1 [shape = 'u32[144,128]{1,0:T(1,128)}', space=vmem, size = 0x12000, scoped, tag = 'internal scratch']
  #allocation2 [shape = 'f32[16,256]{1,0:T(8,128)}', space=vmem, size = 0x4000, scoped, tag = 'scratch operand']
  %s0 = inlined_call_operand.hbm [shape: f32[16,512], index: 0, kind: input, shape index: {}]
  %s1 = inlined_call_operand.hbm [shape: f32[512,256], index: 1, kind: input, shape index: {}]
  %s2 = inlined_call_operand.vmem [shape: f32[1,256], index: 2, kind: input, shape index: {}]
  %s3 = inlined_call_operand.hbm [shape: f32[16,256], index: 3, kind: output, shape index: {}]
  %s4 = sld [smem:[#allocation0]]
  $region38: #{tpu_custom_call.1} parent=0
    _
  %s6 = ssub.s32 1, %s4
  %s7 = scalar_select 0, %s6, %s4
  $region1: #{tpu_custom_call.1} parent=0
    #allocation3 [shape = 'u8[32768]{0}', space=vmem, size = 0x8000, scoped, tag = 'input window, operand 0, single buffered']
    #allocation4 [shape = 's32[1]{0}', space=sflag, size = 0x4, scoped, tag = 'scoped memory for tpu_custom_call.1']
    #allocation5 [shape = 's32[1]{0}', space=sflag, size = 0x4, scoped, tag = 'scoped memory for tpu_custom_call.1']
    #allocation6 [shape = 'u8[524288]{0}', space=vmem, size = 0x80000, scoped, tag = 'input window, operand 1, single buffered']
    #allocation7 [shape = 's32[1]{0}', space=sflag, size = 0x4, scoped, tag = 'scoped memory for tpu_custom_call.1']
    #allocation8 [shape = 'u8[16384]{0}', space=vmem, size = 0x4000, scoped, tag = 'output window, operand 0, single buffered']
    %8 = vsyncpa [#allocation4], 0
    %9 = vsyncpa [#allocation7], 0
    %10 = vsyncpa [#allocation5], 0
    // Predicated region
    $region2: #{tpu_custom_call.1} parent=1 // pred_check
      _
    $region3: #{tpu_custom_call.1} parent=1 // pred_check_branch
      %12 = sbr.rel (0) target = $region5
    $region4: #{tpu_custom_call.1} parent=1 // pred_region
      %s14 = ssub.s32 1024, 1024
      %15 = vsyncadd [#allocation4], %s14
      %s16 = sshll.u32 [#allocation3], 4
      %s17 = int_to_ptr.vmem [resolvable:$true] %s16
      %22 = dma.hbm_to_vmem [thread:$0]  %s0, 1024, %s17, [#allocation4], 512, 512, 32
    $region5: #{tpu_custom_call.1} parent=1 // pred_fallthru
      _
    // Predicated region
    $region6: #{tpu_custom_call.1} parent=1 // pred_check
      _
    $region7: #{tpu_custom_call.1} parent=1 // pred_check_branch
      %24 = sbr.rel (0) target = $region9
    $region8: #{tpu_custom_call.1} parent=1 // pred_region
      %s26 = ssub.s32 16384, 16384
      %27 = vsyncadd [#allocation7], %s26
      %s28 = sshll.u32 [#allocation6], 4
      %s29 = int_to_ptr.vmem [resolvable:$true] %s28
      %34 = dma.hbm_to_vmem [thread:$0]  %s1, 16384, %s29, [#allocation7], 256, 256, 16
    $region9: #{tpu_custom_call.1} parent=1 // pred_fallthru
      _
    // Predicated region
    $region10: #{tpu_custom_call.1} parent=1 // pred_check
      _
    $region11: #{tpu_custom_call.1} parent=1 // pred_check_branch
      %36 = sbr.rel (0) target = $region13
    $region12: #{tpu_custom_call.1} parent=1 // pred_region
      _
    $region13: #{tpu_custom_call.1} parent=1 // pred_fallthru
      _
    // Predicated region
    $region14: #{tpu_custom_call.1} parent=1 // pred_check
      _
    $region15: #{tpu_custom_call.1} parent=1 // pred_check_branch
      %38 = sbr.rel (0) target = $region17
    $region16: #{tpu_custom_call.1} parent=1 // pred_region
      %39 = dma.done [#allocation4], 1024
    $region17: #{tpu_custom_call.1} parent=1 // pred_fallthru
      _
    // Predicated region
    $region18: #{tpu_custom_call.1} parent=1 // pred_check
      _
    $region19: #{tpu_custom_call.1} parent=1 // pred_check_branch
      %41 = sbr.rel (0) target = $region21
    $region20: #{tpu_custom_call.1} parent=1 // pred_region
      %42 = dma.done [#allocation7], 16384
    $region21: #{tpu_custom_call.1} parent=1 // pred_fallthru
      _
    %p43 = scmp.eq.s32.totalorder 0, 0
    // Predicated region
    $region22: #{tpu_custom_call.1} parent=1 // pred_check
      %p44 = pneg %p43
    $region23: #{tpu_custom_call.1} parent=1 // pred_check_branch
      %46 = sbr.rel (%p44) target = $region25
    $region24: #{tpu_custom_call.1} parent=1 // pred_region
      %47 = vst [vmem:[#allocation2] sm:$0xff] 0.0
      %48 = vst [vmem:[#allocation2 + $0x8] sm:$0xff] 0.0
      %49 = vst [vmem:[#allocation2 + $0x10] sm:$0xff] 0.0
      %50 = vst [vmem:[#allocation2 + $0x18] sm:$0xff] 0.0
    $region25: #{tpu_custom_call.1} parent=1 // pred_fallthru
      _
    %v51 = vld [vmem:[#allocation2] sm:$0xff]
    %v52 = vld [vmem:[#allocation2 + $0x8] sm:$0xff]
    %v53 = vld [vmem:[#allocation2 + $0x10] sm:$0xff]
    %v54 = vld [vmem:[#allocation2 + $0x18] sm:$0xff]
    %v55 = vld [vmem:[#allocation3] sm:$0xff]
    %v56 = vld [vmem:[#allocation3 + $0x8] sm:$0xff]
    %v57 = vld [vmem:[#allocation3 + $0x10] sm:$0xff]
    %v58 = vld [vmem:[#allocation3 + $0x18] sm:$0xff]
    %v59 = vld [vmem:[#allocation3 + $0x20] sm:$0xff]
    %v60 = vld [vmem:[#allocation3 + $0x28] sm:$0xff]
    %v61 = vld [vmem:[#allocation3 + $0x30] sm:$0xff]
    %v62 = vld [vmem:[#allocation3 + $0x38] sm:$0xff]
    %v63 = vld [vmem:[#allocation6] sm:$0xff]
    %v64 = vld [vmem:[#allocation6 + $0x8] sm:$0xff]
    %v65 = vld [vmem:[#allocation6 + $0x10] sm:$0xff]
    %v66 = vld [vmem:[#allocation6 + $0x18] sm:$0xff]
    %v67 = vld [vmem:[#allocation6 + $0x20] sm:$0xff]
    %v68 = vld [vmem:[#allocation6 + $0x28] sm:$0xff]
    %v69 = vld [vmem:[#allocation6 + $0x30] sm:$0xff]
    %v70 = vld [vmem:[#allocation6 + $0x38] sm:$0xff]
    %v71 = vld [vmem:[#allocation6 + $0x40] sm:$0xff]
    %v72 = vld [vmem:[#allocation6 + $0x48] sm:$0xff]
    %v73 = vld [vmem:[#allocation6 + $0x50] sm:$0xff]
    %v74 = vld [vmem:[#allocation6 + $0x58] sm:$0xff]
    %v75 = vld [vmem:[#allocation6 + $0x60] sm:$0xff]
    %v76 = vld [vmem:[#allocation6 + $0x68] sm:$0xff]
    %v77 = vld [vmem:[#allocation6 + $0x70] sm:$0xff]
    %v78 = vld [vmem:[#allocation6 + $0x78] sm:$0xff]
    %v79 = vld [vmem:[#allocation6 + $0x80] sm:$0xff]
    %v80 = vld [vmem:[#allocation6 + $0x88] sm:$0xff]
    %v81 = vld [vmem:[#allocation6 + $0x90] sm:$0xff]
    %v82 = vld [vmem:[#allocation6 + $0x98] sm:$0xff]
    %v83 = vld [vmem:[#allocation6 + $0xa0] sm:$0xff]
    %v84 = vld [vmem:[#allocation6 + $0xa8] sm:$0xff]
    %v85 = vld [vmem:[#allocation6 + $0xb0] sm:$0xff]
    %v86 = vld [vmem:[#allocation6 + $0xb8] sm:$0xff]
    %v87 = vld [vmem:[#allocation6 + $0xc0] sm:$0xff]
    %v88 = vld [vmem:[#allocation6 + $0xc8] sm:$0xff]
    %v89 = vld [vmem:[#allocation6 + $0xd0] sm:$0xff]
    %v90 = vld [vmem:[#allocation6 + $0xd8] sm:$0xff]
    %v91 = vld [vmem:[#allocation6 + $0xe0] sm:$0xff]
    %v92 = vld [vmem:[#allocation6 + $0xe8] sm:$0xff]
    %v93 = vld [vmem:[#allocation6 + $0xf0] sm:$0xff]
    %v94 = vld [vmem:[#allocation6 + $0xf8] sm:$0xff]
    %v95 = vld [vmem:[#allocation6 + $0x100] sm:$0xff]
    %v96 = vld [vmem:[#allocation6 + $0x108] sm:$0xff]
    %v97 = vld [vmem:[#allocation6 + $0x110] sm:$0xff]
    %v98 = vld [vmem:[#allocation6 + $0x118] sm:$0xff]
    %v99 = vld [vmem:[#allocation6 + $0x120] sm:$0xff]
    %v100 = vld [vmem:[#allocation6 + $0x128] sm:$0xff]
    %v101 = vld [vmem:[#allocation6 + $0x130] sm:$0xff]
    %v102 = vld [vmem:[#allocation6 + $0x138] sm:$0xff]
    %v103 = vld [vmem:[#allocation6 + $0x140] sm:$0xff]
    %v104 = vld [vmem:[#allocation6 + $0x148] sm:$0xff]
    %v105 = vld [vmem:[#allocation6 + $0x150] sm:$0xff]
    %v106 = vld [vmem:[#allocation6 + $0x158] sm:$0xff]
    %v107 = vld [vmem:[#allocation6 + $0x160] sm:$0xff]
    %v108 = vld [vmem:[#allocation6 + $0x168] sm:$0xff]
    %v109 = vld [vmem:[#allocation6 + $0x170] sm:$0xff]
    %v110 = vld [vmem:[#allocation6 + $0x178] sm:$0xff]
    %v111 = vld [vmem:[#allocation6 + $0x180] sm:$0xff]
    %v112 = vld [vmem:[#allocation6 + $0x188] sm:$0xff]
    %v113 = vld [vmem:[#allocation6 + $0x190] sm:$0xff]
    %v114 = vld [vmem:[#allocation6 + $0x198] sm:$0xff]
    %v115 = vld [vmem:[#allocation6 + $0x1a0] sm:$0xff]
    %v116 = vld [vmem:[#allocation6 + $0x1a8] sm:$0xff]
    %v117 = vld [vmem:[#allocation6 + $0x1b0] sm:$0xff]
    %v118 = vld [vmem:[#allocation6 + $0x1b8] sm:$0xff]
    %v119 = vld [vmem:[#allocation6 + $0x1c0] sm:$0xff]
    %v120 = vld [vmem:[#allocation6 + $0x1c8] sm:$0xff]
    %v121 = vld [vmem:[#allocation6 + $0x1d0] sm:$0xff]
    %v122 = vld [vmem:[#allocation6 + $0x1d8] sm:$0xff]
    %v123 = vld [vmem:[#allocation6 + $0x1e0] sm:$0xff]
    %v124 = vld [vmem:[#allocation6 + $0x1e8] sm:$0xff]
    %v125 = vld [vmem:[#allocation6 + $0x1f0] sm:$0xff]
    %v126 = vld [vmem:[#allocation6 + $0x1f8] sm:$0xff]
    %v127 = vld [vmem:[#allocation6 + $0x200] sm:$0xff]
    %v128 = vld [vmem:[#allocation6 + $0x208] sm:$0xff]
    %v129 = vld [vmem:[#allocation6 + $0x210] sm:$0xff]
    %v130 = vld [vmem:[#allocation6 + $0x218] sm:$0xff]
    %v131 = vld [vmem:[#allocation6 + $0x220] sm:$0xff]
    %v132 = vld [vmem:[#allocation6 + $0x228] sm:$0xff]
    %v133 = vld [vmem:[#allocation6 + $0x230] sm:$0xff]
    %v134 = vld [vmem:[#allocation6 + $0x238] sm:$0xff]
    %v135 = vld [vmem:[#allocation6 + $0x240] sm:$0xff]
    %v136 = vld [vmem:[#allocation6 + $0x248] sm:$0xff]
    %v137 = vld [vmem:[#allocation6 + $0x250] sm:$0xff]
    %v138 = vld [vmem:[#allocation6 + $0x258] sm:$0xff]
    %v139 = vld [vmem:[#allocation6 + $0x260] sm:$0xff]
    %v140 = vld [vmem:[#allocation6 + $0x268] sm:$0xff]
    %v141 = vld [vmem:[#allocation6 + $0x270] sm:$0xff]
    %v142 = vld [vmem:[#allocation6 + $0x278] sm:$0xff]
    %v143 = vld [vmem:[#allocation6 + $0x280] sm:$0xff]
    %v144 = vld [vmem:[#allocation6 + $0x288] sm:$0xff]
    %v145 = vld [vmem:[#allocation6 + $0x290] sm:$0xff]
    %v146 = vld [vmem:[#allocation6 + $0x298] sm:$0xff]
    %v147 = vld [vmem:[#allocation6 + $0x2a0] sm:$0xff]
    %v148 = vld [vmem:[#allocation6 + $0x2a8] sm:$0xff]
    %v149 = vld [vmem:[#allocation6 + $0x2b0] sm:$0xff]
    %v150 = vld [vmem:[#allocation6 + $0x2b8] sm:$0xff]
    %v151 = vld [vmem:[#allocation6 + $0x2c0] sm:$0xff]
    %v152 = vld [vmem:[#allocation6 + $0x2c8] sm:$0xff]
    %v153 = vld [vmem:[#allocation6 + $0x2d0] sm:$0xff]
    %v154 = vld [vmem:[#allocation6 + $0x2d8] sm:$0xff]
    %v155 = vld [vmem:[#allocation6 + $0x2e0] sm:$0xff]
    %v156 = vld [vmem:[#allocation6 + $0x2e8] sm:$0xff]
    %v157 = vld [vmem:[#allocation6 + $0x2f0] sm:$0xff]
    %v158 = vld [vmem:[#allocation6 + $0x2f8] sm:$0xff]
    %v159 = vld [vmem:[#allocation6 + $0x300] sm:$0xff]
    %v160 = vld [vmem:[#allocation6 + $0x308] sm:$0xff]
    %v161 = vld [vmem:[#allocation6 + $0x310] sm:$0xff]
    %v162 = vld [vmem:[#allocation6 + $0x318] sm:$0xff]
    %v163 = vld [vmem:[#allocation6 + $0x320] sm:$0xff]
    %v164 = vld [vmem:[#allocation6 + $0x328] sm:$0xff]
    %v165 = vld [vmem:[#allocation6 + $0x330] sm:$0xff]
    %v166 = vld [vmem:[#allocation6 + $0x338] sm:$0xff]
    %v167 = vld [vmem:[#allocation6 + $0x340] sm:$0xff]
    %v168 = vld [vmem:[#allocation6 + $0x348] sm:$0xff]
    %v169 = vld [vmem:[#allocation6 + $0x350] sm:$0xff]
    %v170 = vld [vmem:[#allocation6 + $0x358] sm:$0xff]
    %v171 = vld [vmem:[#allocation6 + $0x360] sm:$0xff]
    %v172 = vld [vmem:[#allocation6 + $0x368] sm:$0xff]
    %v173 = vld [vmem:[#allocation6 + $0x370] sm:$0xff]
    %v174 = vld [vmem:[#allocation6 + $0x378] sm:$0xff]
    %v175 = vld [vmem:[#allocation6 + $0x380] sm:$0xff]
    %v176 = vld [vmem:[#allocation6 + $0x388] sm:$0xff]
    %v177 = vld [vmem:[#allocation6 + $0x390] sm:$0xff]
    %v178 = vld [vmem:[#allocation6 + $0x398] sm:$0xff]
    %v179 = vld [vmem:[#allocation6 + $0x3a0] sm:$0xff]
    %v180 = vld [vmem:[#allocation6 + $0x3a8] sm:$0xff]
    %v181 = vld [vmem:[#allocation6 + $0x3b0] sm:$0xff]
    %v182 = vld [vmem:[#allocation6 + $0x3b8] sm:$0xff]
    %v183 = vld [vmem:[#allocation6 + $0x3c0] sm:$0xff]
    %v184 = vld [vmem:[#allocation6 + $0x3c8] sm:$0xff]
    %v185 = vld [vmem:[#allocation6 + $0x3d0] sm:$0xff]
    %v186 = vld [vmem:[#allocation6 + $0x3d8] sm:$0xff]
    %v187 = vld [vmem:[#allocation6 + $0x3e0] sm:$0xff]
    %v188 = vld [vmem:[#allocation6 + $0x3e8] sm:$0xff]
    %v189 = vld [vmem:[#allocation6 + $0x3f0] sm:$0xff]
    %v190 = vld [vmem:[#allocation6 + $0x3f8] sm:$0xff]
    %191 = vmatprep.subr.mxu0 %v64
    %192 = vmatpush1.msra.mxu0 %v63
    %193 = vmatprep.subr.mxu0 %v66
    %194 = vmatpush1.msra.mxu0 %v65
    %195 = vmatprep.subr.mxu0 %v68
    %196 = vmatpush1.msra.mxu0 %v67
    %197 = vmatprep.subr.mxu0 %v70
    %198 = vmatpush1.msra.mxu0 %v69
    %199 = vmatprep.subr.mxu0 %v72
    %200 = vmatpush1.msra.mxu0 %v71
    %201 = vmatprep.subr.mxu0 %v74
    %202 = vmatpush1.msra.mxu0 %v73
    %203 = vmatprep.subr.mxu0 %v76
    %204 = vmatpush1.msra.mxu0 %v75
    %205 = vmatprep.subr.mxu0 %v78
    %206 = vmatpush1.msra.mxu0 %v77
    %207 = vmatprep.subr.mxu0 %v80
    %208 = vmatpush1.msra.mxu0 %v79
    %209 = vmatprep.subr.mxu0 %v82
    %210 = vmatpush1.msra.mxu0 %v81
    %211 = vmatprep.subr.mxu0 %v84
    %212 = vmatpush1.msra.mxu0 %v83
    %213 = vmatprep.subr.mxu0 %v86
    %214 = vmatpush1.msra.mxu0 %v85
    %215 = vmatprep.subr.mxu0 %v88
    %216 = vmatpush1.msra.mxu0 %v87
    %217 = vmatprep.subr.mxu0 %v90
    %218 = vmatpush1.msra.mxu0 %v89
    %219 = vmatprep.subr.mxu0 %v92
    %220 = vmatpush1.msra.mxu0 %v91
    %221 = vmatprep.subr.mxu0 %v94
    %222 = vmatpush1.msra.mxu0 %v93
    %223 = vmatprep.subr.mxu0 %v96
    %224 = vmatpush1.msra.mxu0 %v95
    %225 = vmatprep.subr.mxu0 %v98
    %226 = vmatpush1.msra.mxu0 %v97
    %227 = vmatprep.subr.mxu0 %v100
    %228 = vmatpush1.msra.mxu0 %v99
    %229 = vmatprep.subr.mxu0 %v102
    %230 = vmatpush1.msra.mxu0 %v101
    %231 = vmatprep.subr.mxu0 %v104
    %232 = vmatpush1.msra.mxu0 %v103
    %233 = vmatprep.subr.mxu0 %v106
    %234 = vmatpush1.msra.mxu0 %v105
    %235 = vmatprep.subr.mxu0 %v108
    %236 = vmatpush1.msra.mxu0 %v107
    %237 = vmatprep.subr.mxu0 %v110
    %238 = vmatpush1.msra.mxu0 %v109
    %239 = vmatprep.subr.mxu0 %v112
    %240 = vmatpush1.msra.mxu0 %v111
    %241 = vmatprep.subr.mxu0 %v114
    %242 = vmatpush1.msra.mxu0 %v113
    %243 = vmatprep.subr.mxu0 %v116
    %244 = vmatpush1.msra.mxu0 %v115
    %245 = vmatprep.subr.mxu0 %v118
    %246 = vmatpush1.msra.mxu0 %v117
    %247 = vmatprep.subr.mxu0 %v120
    %248 = vmatpush1.msra.mxu0 %v119
    %249 = vmatprep.subr.mxu0 %v122
    %250 = vmatpush1.msra.mxu0 %v121
    %251 = vmatprep.subr.mxu0 %v124
    %252 = vmatpush1.msra.mxu0 %v123
    %253 = vmatprep.subr.mxu0 %v126
    %254 = vmatpush1.msra.mxu0 %v125
    %255 = vmatprep.mubr.f32.mxu0 %v56
    %256 = vmatmul.mubr.f32.gmra.mrb[0].mxu0 %v55
    %v257 = vpop.f32.mrb[0].mxu0
    %v258 = vadd.f32 0.0, %v257
    %v259 = vpop.f32.mrb[0].mxu0
    %v260 = vadd.f32 0.0, %v259
    %261 = vmatprep.mubr.f32.mxu0 %v60
    %262 = vmatmul.mubr.f32.gmra.mrb[0].mxu0 %v59
    %v263 = vpop.f32.mrb[0].mxu0
    %v264 = vadd.f32 0.0, %v263
    %v265 = vpop.f32.mrb[0].mxu0
    %v266 = vadd.f32 0.0, %v265
    %267 = vdwg.mxu0
    %268 = vmatprep.subr.mxu0 %v128
    %269 = vmatpush1.msra.mxu0 %v127
    %270 = vmatprep.subr.mxu0 %v130
    %271 = vmatpush1.msra.mxu0 %v129
    %272 = vmatprep.subr.mxu0 %v132
    %273 = vmatpush1.msra.mxu0 %v131
    %274 = vmatprep.subr.mxu0 %v134
    %275 = vmatpush1.msra.mxu0 %v133
    %276 = vmatprep.subr.mxu0 %v136
    %277 = vmatpush1.msra.mxu0 %v135
    %278 = vmatprep.subr.mxu0 %v138
    %279 = vmatpush1.msra.mxu0 %v137
    %280 = vmatprep.subr.mxu0 %v140
    %281 = vmatpush1.msra.mxu0 %v139
    %282 = vmatprep.subr.mxu0 %v142
    %283 = vmatpush1.msra.mxu0 %v141
    %284 = vmatprep.subr.mxu0 %v144
    %285 = vmatpush1.msra.mxu0 %v143
    %286 = vmatprep.subr.mxu0 %v146
    %287 = vmatpush1.msra.mxu0 %v145
    %288 = vmatprep.subr.mxu0 %v148
    %289 = vmatpush1.msra.mxu0 %v147
    %290 = vmatprep.subr.mxu0 %v150
    %291 = vmatpush1.msra.mxu0 %v149
    %292 = vmatprep.subr.mxu0 %v152
    %293 = vmatpush1.msra.mxu0 %v151
    %294 = vmatprep.subr.mxu0 %v154
    %295 = vmatpush1.msra.mxu0 %v153
    %296 = vmatprep.subr.mxu0 %v156
    %297 = vmatpush1.msra.mxu0 %v155
    %298 = vmatprep.subr.mxu0 %v158
    %299 = vmatpush1.msra.mxu0 %v157
    %300 = vmatprep.subr.mxu0 %v160
    %301 = vmatpush1.msra.mxu0 %v159
    %302 = vmatprep.subr.mxu0 %v162
    %303 = vmatpush1.msra.mxu0 %v161
    %304 = vmatprep.subr.mxu0 %v164
    %305 = vmatpush1.msra.mxu0 %v163
    %306 = vmatprep.subr.mxu0 %v166
    %307 = vmatpush1.msra.mxu0 %v165
    %308 = vmatprep.subr.mxu0 %v168
    %309 = vmatpush1.msra.mxu0 %v167
    %310 = vmatprep.subr.mxu0 %v170
    %311 = vmatpush1.msra.mxu0 %v169
    %312 = vmatprep.subr.mxu0 %v172
    %313 = vmatpush1.msra.mxu0 %v171
    %314 = vmatprep.subr.mxu0 %v174
    %315 = vmatpush1.msra.mxu0 %v173
    %316 = vmatprep.subr.mxu0 %v176
    %317 = vmatpush1.msra.mxu0 %v175
    %318 = vmatprep.subr.mxu0 %v178
    %319 = vmatpush1.msra.mxu0 %v177
    %320 = vmatprep.subr.mxu0 %v180
    %321 = vmatpush1.msra.mxu0 %v179
    %322 = vmatprep.subr.mxu0 %v182
    %323 = vmatpush1.msra.mxu0 %v181
    %324 = vmatprep.subr.mxu0 %v184
    %325 = vmatpush1.msra.mxu0 %v183
    %326 = vmatprep.subr.mxu0 %v186
    %327 = vmatpush1.msra.mxu0 %v185
    %328 = vmatprep.subr.mxu0 %v188
    %329 = vmatpush1.msra.mxu0 %v187
    %330 = vmatprep.subr.mxu0 %v190
    %331 = vmatpush1.msra.mxu0 %v189
    %332 = vmatprep.mubr.f32.mxu0 %v58
    %333 = vmatmul.mubr.f32.gmra.mrb[0].mxu0 %v57
    %v334 = vpop.f32.mrb[0].mxu0
    %v335 = vadd.f32 %v258, %v334
    %v336 = vpop.f32.mrb[0].mxu0
    %v337 = vadd.f32 %v260, %v336
    %338 = vmatprep.mubr.f32.mxu0 %v62
    %339 = vmatmul.mubr.f32.gmra.mrb[0].mxu0 %v61
    %v340 = vpop.f32.mrb[0].mxu0
    %v341 = vadd.f32 %v264, %v340
    %v342 = vpop.f32.mrb[0].mxu0
    %v343 = vadd.f32 %v266, %v342
    %344 = vdwg.mxu0
    %v345 = vadd.f32 %v51, %v335
    %v346 = vadd.f32 %v52, %v337
    %v347 = vadd.f32 %v53, %v341
    %v348 = vadd.f32 %v54, %v343
    %349 = vst [vmem:[#allocation2] sm:$0xff] %v345
    %350 = vst [vmem:[#allocation2 + $0x8] sm:$0xff] %v346
    %351 = vst [vmem:[#allocation2 + $0x10] sm:$0xff] %v347
    %352 = vst [vmem:[#allocation2 + $0x18] sm:$0xff] %v348
    // Predicated region
    $region26: #{tpu_custom_call.1} parent=1 // pred_check
      %p353 = pneg %p43
    $region27: #{tpu_custom_call.1} parent=1 // pred_check_branch
      %355 = sbr.rel (%p353) target = $region29
    $region28: #{tpu_custom_call.1} parent=1 // pred_region
      %v356 = vld [vmem:[#allocation2] sm:$0xff]
      %v357 = vld [vmem:[#allocation2 + $0x8] sm:$0xff]
      %v358 = vld [vmem:[#allocation2 + $0x10] sm:$0xff]
      %v359 = vld [vmem:[#allocation2 + $0x18] sm:$0xff]
      %v360 = vld [vmem:[%s2] sm:$0x3]
      %v362 = vlaneseq
      %v363 = vshrl.u32 %v362, 7
      %v364 = vsub.s32 0, %v363
      %v365 = vrot.slane %v360, %v364
      %v366 = vlaneseq
      %v367 = vshrl.u32 %v366, 7
      %v368 = vsub.s32 1, %v367
      %v369 = vrot.slane %v360, %v368
      %v372 = vadd.f32 %v356, %v365
      %v373 = vadd.f32 %v357, %v369
      %v374 = vadd.f32 %v358, %v365
      %v375 = vadd.f32 %v359, %v369
      %376 = vst [vmem:[#allocation8] sm:$0xff] %v372
      %377 = vst [vmem:[#allocation8 + $0x8] sm:$0xff] %v373
      %378 = vst [vmem:[#allocation8 + $0x10] sm:$0xff] %v374
      %379 = vst [vmem:[#allocation8 + $0x18] sm:$0xff] %v375
    $region29: #{tpu_custom_call.1} parent=1 // pred_fallthru
      _
    // Predicated region
    $region30: #{tpu_custom_call.1} parent=1 // pred_check
      _
    $region31: #{tpu_custom_call.1} parent=1 // pred_check_branch
      %381 = sbr.rel (0) target = $region33
    $region32: #{tpu_custom_call.1} parent=1 // pred_region
      %s383 = ssub.s32 512, 512
      %384 = vsyncadd [#allocation5], %s383
      %s385 = sshll.u32 [#allocation8], 4
      %s386 = int_to_ptr.vmem [resolvable:$true] %s385
      %391 = dma.vmem_to_hbm [thread:$0]  %s386, 512, %s3, [#allocation5], 256, 256, 16
    $region33: #{tpu_custom_call.1} parent=1 // pred_fallthru
      _
    // Predicated region
    $region34: #{tpu_custom_call.1} parent=1 // pred_check
      _
    $region35: #{tpu_custom_call.1} parent=1 // pred_check_branch
      %393 = sbr.rel (0) target = $region37
    $region36: #{tpu_custom_call.1} parent=1 // pred_region
      %394 = dma.done [#allocation5], 512
    $region37: #{tpu_custom_call.1} parent=1 // pred_fallthru
      _
    %395 = vsyncpa [#allocation4], 1
    %396 = vsyncpa [#allocation7], 1
    %397 = vsyncpa [#allocation5], 1

</llo_original>
